<compile_context>
chip_gen: v5e
topology: v5e:2x2
jax: 0.10.0
libtpu: 0.0.40
codegen_flags: <defaults>
</compile_context>

<pallas_src>
import jax
import jax.numpy as jnp
from jax.experimental import pallas as pl
from jax.experimental.pallas import tpu as pltpu


LANE = 128       # TPU lane width; output feature dims are padded to this.
ROW_ALIGN = 16   # row-tile alignment (bf16 sublane packing; multiple of 8)


def _round_up(n, m):
    return ((n + m - 1) // m) * m


def _vmem_capacity_bytes():
    """Physical VMEM of the current TPU generation (fallback: v7x's 64 MiB)."""
    try:
        return int(pltpu.get_tpu_info().vmem_capacity_bytes)
    except Exception:
        return 64 * 2**20


def _pad2d(a, rows, cols, dtype):
    """Zero-pad a 2-D array to (rows, cols) and cast to dtype."""
    a = jnp.asarray(a)
    if a.ndim == 1:             # accept 1-D bias vectors (common checkpoint layout)
        a = a.reshape(1, -1)
    r, c = a.shape
    out = jnp.zeros((rows, cols), dtype)
    return out.at[:r, :c].set(a.astype(dtype))


def mlp_readout_kernel(x_ref, w0_ref, b0_ref, w1_ref, b1_ref, w2_ref, b2_ref,
                       o_ref):
    """Fused 3-layer MLP readout on one row-block of x.

    Weights/biases live whole in VMEM (unblocked specs); x / out are pipelined
    row blocks. The x tile is cast to the compute dtype in-kernel (no extra HBM
    pass in the wrapper). All matmuls accumulate in f32 on the MXU; activations
    are cast back to the compute dtype (bf16 or f32) between layers.
    """
    cdt = w0_ref.dtype
    y = x_ref[...].astype(cdt)
    # layer 0 + ReLU
    y = jnp.dot(y, w0_ref[...], preferred_element_type=jnp.float32) + b0_ref[...]
    y = jnp.maximum(y, 0.0).astype(cdt)
    # layer 1 + ReLU
    y = jnp.dot(y, w1_ref[...], preferred_element_type=jnp.float32) + b1_ref[...]
    y = jnp.maximum(y, 0.0).astype(cdt)
    # final linear (no activation)
    y = jnp.dot(y, w2_ref[...], preferred_element_type=jnp.float32) + b2_ref[...]
    o_ref[...] = y.astype(o_ref.dtype)


def mlp_readout(x, params, *, block_rows=1024, compute_dtype=jnp.bfloat16,
                out_dtype=None, slice_output=True, x_buffers=None):
    """x: (N, input_dim). params: w0,b0,w1,b1,w2,b2; weights stored as (in, out).

    compute_dtype: dtype of x/weights on the MXU (f32 accumulate regardless).
    out_dtype:     dtype written back to HBM (default: x.dtype).
    slice_output:  slice the 128-lane-padded output back to output_dim.
    x_buffers:     optional pipeline depth for the x stream (e.g. 3 on v6e).
    """
    N, D = x.shape
    w0, b0 = params["w0"], params["b0"]
    w1, b1 = params["w1"], params["b1"]
    w2, b2 = params["w2"], params["b2"]
    H0, H1, OUT = w0.shape[1], w1.shape[1], w2.shape[1]

    cdt = jnp.dtype(compute_dtype)
    odt = jnp.dtype(out_dtype) if out_dtype is not None else x.dtype

    # --- pad OUTPUT feature dims to 128 lanes (zeros => exact math).        ---
    # --- layer-0 contraction dim stays D, so x needs no wrapper pad/cast.   ---
    H0p, H1p, OUTp = (_round_up(d, LANE) for d in (H0, H1, OUT))
    w0p = _pad2d(w0, D, H0p, cdt)
    w1p = _pad2d(w1, H0p, H1p, cdt)
    w2p = _pad2d(w2, H1p, OUTp, cdt)
    # biases stay f32 (added after the f32 MXU accumulate)
    b0p = _pad2d(b0, 1, H0p, jnp.float32)
    b1p = _pad2d(b1, 1, H1p, jnp.float32)
    b2p = _pad2d(b2, 1, OUTp, jnp.float32)

    # --- row tiling: >=2 near-equal blocks so both v7x TensorCores get work ---
    if N <= 2 * ROW_ALIGN:
        tm = N                                  # tiny: single full-extent block
    else:
        n_blocks = max(2, pl.cdiv(N, block_rows))
        tm = min(_round_up(pl.cdiv(N, n_blocks), ROW_ALIGN),
                 _round_up(block_rows, ROW_ALIGN))
    grid = (pl.cdiv(N, tm),)

    # --- generation-aware VMEM budget + cost estimate ---
    csize = cdt.itemsize
    xsize = x.dtype.itemsize
    osize = odt.itemsize
    weight_bytes = (D * H0p + H0p * H1p + H1p * OUTp) * csize
    bias_bytes = (H0p + H1p + OUTp) * 4
    io_bytes = 2 * tm * (D * xsize + OUTp * osize)     # double-buffered x / out tiles
    needed = 2 * weight_bytes + bias_bytes + io_bytes  # honest (2x weights) headroom
    vmem_cap = int(0.75 * _vmem_capacity_bytes())      # ~48 MiB v7x, ~96 MiB v5e/v6e
    vmem_limit = int(min(vmem_cap, max(32 * 2**20, 2 * needed)))

    cost = pl.CostEstimate(
        flops=2 * N * (D * H0p + H0p * H1p + H1p * OUTp),
        transcendentals=0,
        bytes_accessed=N * D * xsize + weight_bytes + bias_bytes + N * OUTp * osize,
    )

    if x_buffers is None:
        x_spec = pl.BlockSpec((tm, D), lambda i: (i, 0))
    else:
        x_spec = pl.BlockSpec((tm, D), lambda i: (i, 0),
                              pipeline_mode=pl.Buffered(x_buffers))

    vmem = pltpu.MemorySpace.VMEM
    out_padded = pl.pallas_call(
        mlp_readout_kernel,
        out_shape=jax.ShapeDtypeStruct((N, OUTp), odt),
        grid_spec=pltpu.PrefetchScalarGridSpec(
            num_scalar_prefetch=0,
            grid=grid,
            in_specs=[
                x_spec,                           # x row-block (pipelined, cast in-kernel)
                pl.BlockSpec(memory_space=vmem),  # w0 (whole, resident)
                pl.BlockSpec(memory_space=vmem),  # b0
                pl.BlockSpec(memory_space=vmem),  # w1
                pl.BlockSpec(memory_space=vmem),  # b1
                pl.BlockSpec(memory_space=vmem),  # w2
                pl.BlockSpec(memory_space=vmem),  # b2
            ],
            out_specs=pl.BlockSpec((tm, OUTp), lambda i: (i, 0)),
        ),
        compiler_params=pltpu.CompilerParams(
            dimension_semantics=("parallel",),
            vmem_limit_bytes=vmem_limit),
        cost_estimate=cost,
    )(x, w0p, b0p, w1p, b1p, w2p, b2p)

    if slice_output and OUTp != OUT:
        return out_padded[:, :OUT]
    return out_padded


def init_params(key, input_dim, output_dim, L=2, dtype=jnp.float32):
    """Deterministic init mimicking torch.nn.Linear default U[-1/sqrt(fan_in), ...]."""
    dims = [input_dim // (2 ** l) for l in range(L + 1)] + [output_dim]
    params = {}
    for l in range(L + 1):
        fan_in, fan_out = dims[l], dims[l + 1]
        key, kw, kb = jax.random.split(key, 3)
        bound = 1.0 / jnp.sqrt(jnp.asarray(fan_in, dtype))
        # stored as (in, out) == torch weight (out, in) transposed
        params[f"w{l}"] = jax.random.uniform(kw, (fan_in, fan_out), dtype,
                                             minval=-bound, maxval=bound)
        # 1-D bias (common checkpoint layout) — exercises the reshape handling
        params[f"b{l}"] = jax.random.uniform(kb, (fan_out,), dtype,
                                             minval=-bound, maxval=bound)
    return params


def mlp_readout_ref(x, params, compute_dtype=jnp.bfloat16, out_dtype=None):
    """Pure-JAX reference matching the kernel's dtype policy."""
    cdt = jnp.dtype(compute_dtype)
    odt = jnp.dtype(out_dtype) if out_dtype is not None else x.dtype
    y = x.astype(cdt)
    for l in range(2):
        w = params[f"w{l}"].astype(cdt)
        b = jnp.asarray(params[f"b{l}"]).reshape(1, -1).astype(jnp.float32)
        y = jnp.dot(y, w, preferred_element_type=jnp.float32,
                    precision=jax.lax.Precision.HIGHEST) + b
        y = jnp.maximum(y, 0.0).astype(cdt)
    w = params["w2"].astype(cdt)
    b = jnp.asarray(params["b2"]).reshape(1, -1).astype(jnp.float32)
    y = jnp.dot(y, w, preferred_element_type=jnp.float32,
                precision=jax.lax.Precision.HIGHEST) + b
    return y.astype(odt)


if __name__ == "__main__":
    key = jax.random.PRNGKey(0)

    # --- Test 1: feature_dim=128 (hidden 64/32), num_classes=10, N=600 rows.
    # tm=304 -> 2-block grid (304 + 296 masked) balancing v7x's TensorCores.
    N, INPUT_DIM, OUTPUT_DIM = 600, 128, 10
    key, kx, kp = jax.random.split(key, 3)
    x = jax.random.normal(kx, (N, INPUT_DIM), jnp.float32)
    params = init_params(kp, INPUT_DIM, OUTPUT_DIM, L=2)

    # default bfloat16 compute path (recommended on v5e/v6e/v7x)
    out_bf16 = jax.block_until_ready(mlp_readout(x, params))
    ref_bf16 = mlp_readout_ref(x, params, compute_dtype=jnp.bfloat16)
    assert out_bf16.shape == (N, OUTPUT_DIM)
    assert jnp.allclose(out_bf16, ref_bf16, atol=3e-2, rtol=3e-2), \
        float(jnp.max(jnp.abs(out_bf16 - ref_bf16)))

    # float32 compute path (kernel uses default MXU precision; relaxed tolerance)
    out_f32 = jax.block_until_ready(mlp_readout(x, params, compute_dtype=jnp.float32))
    ref_f32 = mlp_readout_ref(x, params, compute_dtype=jnp.float32)
    assert out_f32.shape == (N, OUTPUT_DIM)
    assert jnp.allclose(out_f32, ref_f32, atol=2e-3, rtol=2e-3), \
        float(jnp.max(jnp.abs(out_f32 - ref_f32)))

    # --- Test 2: non-128-aligned feature_dim=96 (hidden 48/24), 7 classes,
    # N=200 rows, bf16 out_dtype to exercise the full-D block (no wrapper pad)
    # and the halved lane-padded writeback.
    N2, IN2, OUT2 = 200, 96, 7
    key, kx2, kp2 = jax.random.split(key, 3)
    x2 = jax.random.normal(kx2, (N2, IN2), jnp.float32)
    params2 = init_params(kp2, IN2, OUT2, L=2)

    out2 = jax.block_until_ready(
        mlp_readout(x2, params2, compute_dtype=jnp.bfloat16, out_dtype=jnp.bfloat16))
    ref2 = mlp_readout_ref(x2, params2, compute_dtype=jnp.bfloat16,
                           out_dtype=jnp.bfloat16)
    assert out2.shape == (N2, OUT2)
    assert jnp.allclose(out2.astype(jnp.float32), ref2.astype(jnp.float32),
                        atol=3e-2, rtol=3e-2), \
        float(jnp.max(jnp.abs(out2.astype(jnp.float32) - ref2.astype(jnp.float32))))

    print("KERNEL_OK")
</pallas_src>

<mosaic_0001>
module attributes {stable_mosaic.version = 11 : i64} {
  func.func @mlp_readout_kernel(%arg0: i32, %arg1: memref<304x128xf32, #tpu.memory_space<vmem>>, %arg2: memref<128x128xbf16, #tpu.memory_space<vmem>>, %arg3: memref<1x128xf32, #tpu.memory_space<vmem>>, %arg4: memref<128x128xbf16, #tpu.memory_space<vmem>>, %arg5: memref<1x128xf32, #tpu.memory_space<vmem>>, %arg6: memref<128x128xbf16, #tpu.memory_space<vmem>>, %arg7: memref<1x128xf32, #tpu.memory_space<vmem>>, %arg8: memref<304x128xf32, #tpu.memory_space<vmem>>) attributes {dimension_semantics = [#tpu.dimension_semantics<parallel>], iteration_bounds = array<i64: 2>, scalar_prefetch = 0 : i64, scratch_operands = 0 : i64, tpu.core_type = #tpu.core_type<tc>, window_params = [{transform_indices = @transform_0, window_bounds = array<i64: 304, 128>}, {pipeline_mode = #tpu.pipeline_mode<synchronous>, transform_indices = @transform_1, window_bounds = array<i64: 128, 128>}, {pipeline_mode = #tpu.pipeline_mode<synchronous>, transform_indices = @transform_2, window_bounds = array<i64: 1, 128>}, {pipeline_mode = #tpu.pipeline_mode<synchronous>, transform_indices = @transform_3, window_bounds = array<i64: 128, 128>}, {pipeline_mode = #tpu.pipeline_mode<synchronous>, transform_indices = @transform_4, window_bounds = array<i64: 1, 128>}, {pipeline_mode = #tpu.pipeline_mode<synchronous>, transform_indices = @transform_5, window_bounds = array<i64: 128, 128>}, {pipeline_mode = #tpu.pipeline_mode<synchronous>, transform_indices = @transform_6, window_bounds = array<i64: 1, 128>}, {transform_indices = @transform_7, window_bounds = array<i64: 304, 128>}]} {
    %c0 = arith.constant 0 : index
    %c0_0 = arith.constant 0 : index
    %0 = vector.load %arg1[%c0, %c0_0] : memref<304x128xf32, #tpu.memory_space<vmem>>, vector<304x128xf32>
    %1 = arith.truncf %0 : vector<304x128xf32> to vector<304x128xbf16>
    %c0_1 = arith.constant 0 : index
    %c0_2 = arith.constant 0 : index
    %2 = vector.load %arg2[%c0_1, %c0_2] : memref<128x128xbf16, #tpu.memory_space<vmem>>, vector<128x128xbf16>
    %cst = arith.constant dense<0.000000e+00> : vector<304x128xf32>
    %3 = tpu.matmul %1, %2, %cst {dimension_numbers = #tpu.dot_dimension_numbers<[1], [0], [0], [1], [0, 0, 1, 1], [], []>} : vector<304x128xbf16>, vector<128x128xbf16>, vector<304x128xf32> -> vector<304x128xf32>
    %c0_3 = arith.constant 0 : index
    %c0_4 = arith.constant 0 : index
    %4 = vector.load %arg3[%c0_3, %c0_4] : memref<1x128xf32, #tpu.memory_space<vmem>>, vector<1x128xf32>
    %5 = vector.broadcast %4 : vector<1x128xf32> to vector<304x128xf32>
    %6 = arith.addf %3, %5 : vector<304x128xf32>
    %cst_5 = arith.constant 0.000000e+00 : f32
    %7 = vector.broadcast %cst_5 : f32 to vector<304x128xf32>
    %8 = arith.maximumf %6, %7 : vector<304x128xf32>
    %9 = arith.truncf %8 : vector<304x128xf32> to vector<304x128xbf16>
    %c0_6 = arith.constant 0 : index
    %c0_7 = arith.constant 0 : index
    %10 = vector.load %arg4[%c0_6, %c0_7] : memref<128x128xbf16, #tpu.memory_space<vmem>>, vector<128x128xbf16>
    %cst_8 = arith.constant dense<0.000000e+00> : vector<304x128xf32>
    %11 = tpu.matmul %9, %10, %cst_8 {dimension_numbers = #tpu.dot_dimension_numbers<[1], [0], [0], [1], [0, 0, 1, 1], [], []>} : vector<304x128xbf16>, vector<128x128xbf16>, vector<304x128xf32> -> vector<304x128xf32>
    %c0_9 = arith.constant 0 : index
    %c0_10 = arith.constant 0 : index
    %12 = vector.load %arg5[%c0_9, %c0_10] : memref<1x128xf32, #tpu.memory_space<vmem>>, vector<1x128xf32>
    %13 = vector.broadcast %12 : vector<1x128xf32> to vector<304x128xf32>
    %14 = arith.addf %11, %13 : vector<304x128xf32>
    %cst_11 = arith.constant 0.000000e+00 : f32
    %15 = vector.broadcast %cst_11 : f32 to vector<304x128xf32>
    %16 = arith.maximumf %14, %15 : vector<304x128xf32>
    %17 = arith.truncf %16 : vector<304x128xf32> to vector<304x128xbf16>
    %c0_12 = arith.constant 0 : index
    %c0_13 = arith.constant 0 : index
    %18 = vector.load %arg6[%c0_12, %c0_13] : memref<128x128xbf16, #tpu.memory_space<vmem>>, vector<128x128xbf16>
    %cst_14 = arith.constant dense<0.000000e+00> : vector<304x128xf32>
    %19 = tpu.matmul %17, %18, %cst_14 {dimension_numbers = #tpu.dot_dimension_numbers<[1], [0], [0], [1], [0, 0, 1, 1], [], []>} : vector<304x128xbf16>, vector<128x128xbf16>, vector<304x128xf32> -> vector<304x128xf32>
    %c0_15 = arith.constant 0 : index
    %c0_16 = arith.constant 0 : index
    %20 = vector.load %arg7[%c0_15, %c0_16] : memref<1x128xf32, #tpu.memory_space<vmem>>, vector<1x128xf32>
    %21 = vector.broadcast %20 : vector<1x128xf32> to vector<304x128xf32>
    %22 = arith.addf %19, %21 : vector<304x128xf32>
    %c0_17 = arith.constant 0 : index
    %c0_18 = arith.constant 0 : index
    %23 = vector.load %arg8[%c0_17, %c0_18] : memref<304x128xf32, #tpu.memory_space<vmem>>, vector<304x128xf32>
    tpu.vector_store %arg8[%c0_17, %c0_18], %22 {strides = array<i32>} : memref<304x128xf32, #tpu.memory_space<vmem>>, vector<304x128xf32>,
    return
  }
  func.func @transform_0(%arg0: i32) -> (i32, i32) {
    %c0_i32 = arith.constant 0 : i32
    %c0_i32_0 = arith.constant 0 : i32
    return %arg0, %c0_i32 : i32, i32
  }
  func.func @transform_1(%arg0: i32) -> (i32, i32) {
    %c0_i32 = arith.constant 0 : i32
    %c0_i32_0 = arith.constant 0 : i32
    %c0_i32_1 = arith.constant 0 : i32
    return %c0_i32, %c0_i32_0 : i32, i32
  }
  func.func @transform_2(%arg0: i32) -> (i32, i32) {
    %c0_i32 = arith.constant 0 : i32
    %c0_i32_0 = arith.constant 0 : i32
    %c0_i32_1 = arith.constant 0 : i32
    return %c0_i32, %c0_i32_0 : i32, i32
  }
  func.func @transform_3(%arg0: i32) -> (i32, i32) {
    %c0_i32 = arith.constant 0 : i32
    %c0_i32_0 = arith.constant 0 : i32
    %c0_i32_1 = arith.constant 0 : i32
    return %c0_i32, %c0_i32_0 : i32, i32
  }
  func.func @transform_4(%arg0: i32) -> (i32, i32) {
    %c0_i32 = arith.constant 0 : i32
    %c0_i32_0 = arith.constant 0 : i32
    %c0_i32_1 = arith.constant 0 : i32
    return %c0_i32, %c0_i32_0 : i32, i32
  }
  func.func @transform_5(%arg0: i32) -> (i32, i32) {
    %c0_i32 = arith.constant 0 : i32
    %c0_i32_0 = arith.constant 0 : i32
    %c0_i32_1 = arith.constant 0 : i32
    return %c0_i32, %c0_i32_0 : i32, i32
  }
  func.func @transform_6(%arg0: i32) -> (i32, i32) {
    %c0_i32 = arith.constant 0 : i32
    %c0_i32_0 = arith.constant 0 : i32
    %c0_i32_1 = arith.constant 0 : i32
    return %c0_i32, %c0_i32_0 : i32, i32
  }
  func.func @transform_7(%arg0: i32) -> (i32, i32) {
    %c0_i32 = arith.constant 0 : i32
    %c0_i32_0 = arith.constant 0 : i32
    return %arg0, %c0_i32 : i32, i32
  }
}

</mosaic_0001>

<llo_original>
// kernel: tpu_custom_call.1
$region0: #{tpu_custom_call.1}
  #allocation0 [shape = 'u32[]', space=smem, size = 0x4, offset = 0x4, fixed_abs, tag = 'smem constant byte address 0x4 - core index']
  #allocation1 [shape = 'u32[72,128]{1,0:T(1,128)}', space=vmem, size = 0x9000, scoped, tag = 'internal scratch']
  %s0 = inlined_call_operand.hbm [shape: f32[600,128], index: 0, kind: input, shape index: {}]
  %s1 = inlined_call_operand.hbm [shape: bf16[128,128], index: 1, kind: input, shape index: {}]
  %s2 = inlined_call_operand.vmem [shape: f32[1,128], index: 2, kind: input, shape index: {}]
  %s3 = inlined_call_operand.hbm [shape: bf16[128,128], index: 3, kind: input, shape index: {}]
  %s4 = inlined_call_operand.vmem [shape: f32[1,128], index: 4, kind: input, shape index: {}]
  %s5 = inlined_call_operand.hbm [shape: bf16[128,128], index: 5, kind: input, shape index: {}]
  %s6 = inlined_call_operand.vmem [shape: f32[1,128], index: 6, kind: input, shape index: {}]
  %s7 = inlined_call_operand.hbm [shape: f32[600,128], index: 7, kind: output, shape index: {}]
  %s8 = sld [smem:[#allocation0]]
  $region77: #{tpu_custom_call.1} parent=0
    _
  %s10 = ssub.s32 1, %s8
  %s11 = scalar_select 0, %s10, %s8
  $region1: #{tpu_custom_call.1} parent=0
    #allocation2 [shape = 'u8[311296]{0}', space=vmem, size = 0x4c000, scoped, tag = 'input window, operand 0']
    #allocation3 [shape = 's32[2]{0}', space=sflag, size = 0x8, scoped, tag = 'scoped memory for tpu_custom_call.1']
    #allocation4 [shape = 's32[2]{0}', space=sflag, size = 0x8, scoped, tag = 'scoped memory for tpu_custom_call.1']
    #allocation5 [shape = 'u8[32768]{0}', space=vmem, size = 0x8000, scoped, tag = 'input window, operand 1, single buffered']
    #allocation6 [shape = 's32[1]{0}', space=sflag, size = 0x4, scoped, tag = 'scoped memory for tpu_custom_call.1']
    #allocation7 [shape = 'u8[32768]{0}', space=vmem, size = 0x8000, scoped, tag = 'input window, operand 3, single buffered']
    #allocation8 [shape = 'u8[32768]{0}', space=vmem, size = 0x8000, scoped, tag = 'input window, operand 5, single buffered']
    #allocation9 [shape = 's32[1]{0}', space=sflag, size = 0x4, scoped, tag = 'scoped memory for tpu_custom_call.1']
    #allocation10 [shape = 'u8[311296]{0}', space=vmem, size = 0x4c000, scoped, tag = 'output window, operand 0']
    %12 = vsyncpa [#allocation3], 0
    %s13 = scalar_lea.sflag [#allocation3], 1
    %14 = vsyncpa %s13, 0
    %15 = vsyncpa [#allocation6], 0
    %16 = vsyncpa [#allocation9], 0
    %17 = vsyncpa [#allocation4], 0
    %s18 = scalar_lea.sflag [#allocation4], 1
    %19 = vsyncpa %s18, 0
    loop: start=0, step=1, limit=4
    $region2: #{tpu_custom_call.1} parent=1 // loop_pre_header
      _
    $region3: #{tpu_custom_call.1} parent=1 // loop_header
      %s21 = sphi 0, %s25
      %p22 = scmp.ge.s32.totalorder %s21, 4
      %s31 = sphi 0, %s33
      %s34 = sphi 0, %s31
      %s35 = sphi 0, %s34
      %s51 = sphi 0, %s35
      %s55 = sphi 0, %s55
      %s57 = sphi 0, %s55
      %s58 = sphi 0, %s57
      %s72 = sphi 0, %s58
      %s76 = sphi 0, %s76
      %s78 = sphi 0, %s76
      %s79 = sphi 0, %s78
      %s93 = sphi 0, %s79
      %s97 = sphi 0, %s97
      %s99 = sphi 0, %s97
      %s100 = sphi 0, %s99
      %s114 = sphi 0, %s100
      %s118 = sphi 0, %s118
      %s120 = sphi 0, %s118
      %s121 = sphi 0, %s120
      %s135 = sphi 0, %s121
      %s139 = sphi 0, %s139
      %s141 = sphi 0, %s139
      %s142 = sphi 0, %s141
      %s156 = sphi 0, %s142
      %s160 = sphi 0, %s160
      %s162 = sphi 0, %s160
      %s163 = sphi 0, %s162
      %s177 = sphi 0, %s163
      %s183 = sphi 0, %s185
      %s186 = sphi 0, %s183
      %s187 = sphi 0, %s186
      %s203 = sphi 0, %s187
    $region4: #{tpu_custom_call.1} parent=1 // loop_header_branch
      %24 = sbr.rel (%p22) target = $region8
    $region5: #{tpu_custom_call.1} parent=1 // loop_body
      %s26 = ssub.s32 %s21, 1
      %s27 = ssub.s32 %s21, 2
      %s28 = sadd.s32 %s21, 1
      %s29 = ssub.s32 %s21, %s28
      %p30 = scmp.eq.s32.totalorder %s29, 0
      %s32 = sadd.s32 %s31, 1
      %s33 = scalar_select %p30, %s31, %s32
      %p36 = pneg %p30
      %p37 = scmp.eq.s32.totalorder %s21, 1
      %p38 = por %p36, %p37
      %p39 = scmp.ne.s32.totalorder %s31, %s34
      %p40 = scmp.eq.s32.totalorder %s21, 0
      %p41 = por %p39, %p40
      %p42 = scmp.ne.s32.totalorder %s31, %s34
      %p43 = scmp.eq.s32.totalorder %s26, 1
      %p44 = por %p42, %p43
      %p45 = scmp.ne.s32.totalorder %s34, %s35
      %p46 = scmp.eq.s32.totalorder %s26, 0
      %p47 = por %p45, %p46
      %p48 = scmp.ne.s32.totalorder %s34, %s35
      %p49 = scmp.eq.s32.totalorder %s27, 1
      %p50 = por %p48, %p49
      %p52 = scmp.ne.s32.totalorder %s35, %s51
      %p53 = scmp.eq.s32.totalorder %s27, 0
      %p54 = por %p52, %p53
      %s56 = sadd.s32 %s55, 1
      %p59 = scmp.eq.s32.totalorder %s21, 1
      %p60 = scmp.ne.s32.totalorder %s55, %s57
      %p61 = scmp.eq.s32.totalorder %s21, 0
      %p62 = por %p60, %p61
      %p63 = scmp.ne.s32.totalorder %s55, %s57
      %p64 = scmp.eq.s32.totalorder %s26, 1
      %p65 = por %p63, %p64
      %p66 = scmp.ne.s32.totalorder %s57, %s58
      %p67 = scmp.eq.s32.totalorder %s26, 0
      %p68 = por %p66, %p67
      %p69 = scmp.ne.s32.totalorder %s57, %s58
      %p70 = scmp.eq.s32.totalorder %s27, 1
      %p71 = por %p69, %p70
      %p73 = scmp.ne.s32.totalorder %s58, %s72
      %p74 = scmp.eq.s32.totalorder %s27, 0
      %p75 = por %p73, %p74
      %s77 = sadd.s32 %s76, 1
      %p80 = scmp.eq.s32.totalorder %s21, 1
      %p81 = scmp.ne.s32.totalorder %s76, %s78
      %p82 = scmp.eq.s32.totalorder %s21, 0
      %p83 = por %p81, %p82
      %p84 = scmp.ne.s32.totalorder %s76, %s78
      %p85 = scmp.eq.s32.totalorder %s26, 1
      %p86 = por %p84, %p85
      %p87 = scmp.ne.s32.totalorder %s78, %s79
      %p88 = scmp.eq.s32.totalorder %s26, 0
      %p89 = por %p87, %p88
      %p90 = scmp.ne.s32.totalorder %s78, %s79
      %p91 = scmp.eq.s32.totalorder %s27, 1
      %p92 = por %p90, %p91
      %p94 = scmp.ne.s32.totalorder %s79, %s93
      %p95 = scmp.eq.s32.totalorder %s27, 0
      %p96 = por %p94, %p95
      %s98 = sadd.s32 %s97, 1
      %p101 = scmp.eq.s32.totalorder %s21, 1
      %p102 = scmp.ne.s32.totalorder %s97, %s99
      %p103 = scmp.eq.s32.totalorder %s21, 0
      %p104 = por %p102, %p103
      %p105 = scmp.ne.s32.totalorder %s97, %s99
      %p106 = scmp.eq.s32.totalorder %s26, 1
      %p107 = por %p105, %p106
      %p108 = scmp.ne.s32.totalorder %s99, %s100
      %p109 = scmp.eq.s32.totalorder %s26, 0
      %p110 = por %p108, %p109
      %p111 = scmp.ne.s32.totalorder %s99, %s100
      %p112 = scmp.eq.s32.totalorder %s27, 1
      %p113 = por %p111, %p112
      %p115 = scmp.ne.s32.totalorder %s100, %s114
      %p116 = scmp.eq.s32.totalorder %s27, 0
      %p117 = por %p115, %p116
      %s119 = sadd.s32 %s118, 1
      %p122 = scmp.eq.s32.totalorder %s21, 1
      %p123 = scmp.ne.s32.totalorder %s118, %s120
      %p124 = scmp.eq.s32.totalorder %s21, 0
      %p125 = por %p123, %p124
      %p126 = scmp.ne.s32.totalorder %s118, %s120
      %p127 = scmp.eq.s32.totalorder %s26, 1
      %p128 = por %p126, %p127
      %p129 = scmp.ne.s32.totalorder %s120, %s121
      %p130 = scmp.eq.s32.totalorder %s26, 0
      %p131 = por %p129, %p130
      %p132 = scmp.ne.s32.totalorder %s120, %s121
      %p133 = scmp.eq.s32.totalorder %s27, 1
      %p134 = por %p132, %p133
      %p136 = scmp.ne.s32.totalorder %s121, %s135
      %p137 = scmp.eq.s32.totalorder %s27, 0
      %p138 = por %p136, %p137
      %s140 = sadd.s32 %s139, 1
      %p143 = scmp.eq.s32.totalorder %s21, 1
      %p144 = scmp.ne.s32.totalorder %s139, %s141
      %p145 = scmp.eq.s32.totalorder %s21, 0
      %p146 = por %p144, %p145
      %p147 = scmp.ne.s32.totalorder %s139, %s141
      %p148 = scmp.eq.s32.totalorder %s26, 1
      %p149 = por %p147, %p148
      %p150 = scmp.ne.s32.totalorder %s141, %s142
      %p151 = scmp.eq.s32.totalorder %s26, 0
      %p152 = por %p150, %p151
      %p153 = scmp.ne.s32.totalorder %s141, %s142
      %p154 = scmp.eq.s32.totalorder %s27, 1
      %p155 = por %p153, %p154
      %p157 = scmp.ne.s32.totalorder %s142, %s156
      %p158 = scmp.eq.s32.totalorder %s27, 0
      %p159 = por %p157, %p158
      %s161 = sadd.s32 %s160, 1
      %p164 = scmp.eq.s32.totalorder %s21, 1
      %p165 = scmp.ne.s32.totalorder %s160, %s162
      %p166 = scmp.eq.s32.totalorder %s21, 0
      %p167 = por %p165, %p166
      %p168 = scmp.ne.s32.totalorder %s160, %s162
      %p169 = scmp.eq.s32.totalorder %s26, 1
      %p170 = por %p168, %p169
      %p171 = scmp.ne.s32.totalorder %s162, %s163
      %p172 = scmp.eq.s32.totalorder %s26, 0
      %p173 = por %p171, %p172
      %p174 = scmp.ne.s32.totalorder %s162, %s163
      %p175 = scmp.eq.s32.totalorder %s27, 1
      %p176 = por %p174, %p175
      %p178 = scmp.ne.s32.totalorder %s163, %s177
      %p179 = scmp.eq.s32.totalorder %s27, 0
      %p180 = por %p178, %p179
      %s181 = ssub.s32 %s21, %s28
      %p182 = scmp.eq.s32.totalorder %s181, 0
      %s184 = sadd.s32 %s183, 1
      %s185 = scalar_select %p182, %s183, %s184
      %p188 = pneg %p182
      %p189 = scmp.eq.s32.totalorder %s21, 1
      %p190 = por %p188, %p189
      %p191 = scmp.ne.s32.totalorder %s183, %s186
      %p192 = scmp.eq.s32.totalorder %s21, 0
      %p193 = por %p191, %p192
      %p194 = scmp.ne.s32.totalorder %s183, %s186
      %p195 = scmp.eq.s32.totalorder %s26, 1
      %p196 = por %p194, %p195
      %p197 = scmp.ne.s32.totalorder %s186, %s187
      %p198 = scmp.eq.s32.totalorder %s26, 0
      %p199 = por %p197, %p198
      %p200 = scmp.ne.s32.totalorder %s186, %s187
      %p201 = scmp.eq.s32.totalorder %s27, 1
      %p202 = por %p200, %p201
      %p204 = scmp.ne.s32.totalorder %s187, %s203
      %p205 = scmp.eq.s32.totalorder %s27, 0
      %p206 = por %p204, %p205
      %p207 = scmp.le.s32.totalorder 1, %s21
      %p208 = scmp.lt.s32.totalorder %s21, 3
      %p209 = pnand %p207, %p208
      %p210 = pneg %p209
      // Predicated region
      $region9: #{tpu_custom_call.1} parent=5 // pred_check
        _
      $region10: #{tpu_custom_call.1} parent=5 // pred_check_branch
        %212 = sbr.rel (%p209) target = $region12
      $region11: #{tpu_custom_call.1} parent=5 // pred_region
        %s213 = ssub.s32 %s21, 1
        // Predicated region
        $region13: #{tpu_custom_call.1} parent=11 // pred_check
          %p214 = pneg %p68
        $region14: #{tpu_custom_call.1} parent=11 // pred_check_branch
          %216 = sbr.rel (%p214) target = $region16
        $region15: #{tpu_custom_call.1} parent=11 // pred_region
          %218 = vsyncadd [#allocation6], 0
          %s219 = sshll.u32 %s1, 4
          %s220 = int_to_ptr.hbm [resolvable:$true] %s219
          %s221 = sshll.u32 [#allocation5], 4
          %s222 = int_to_ptr.vmem [resolvable:$true] %s221
          %227 = dma.hbm_to_vmem [thread:$0]  %s220, 1024, %s222, [#allocation6], 64, 64, 4
        $region16: #{tpu_custom_call.1} parent=11 // pred_fallthru
          _
        // Predicated region
        $region17: #{tpu_custom_call.1} parent=11 // pred_check
          %p228 = pneg %p89
        $region18: #{tpu_custom_call.1} parent=11 // pred_check_branch
          %230 = sbr.rel (%p228) target = $region20
        $region19: #{tpu_custom_call.1} parent=11 // pred_region
          _
        $region20: #{tpu_custom_call.1} parent=11 // pred_fallthru
          _
        // Predicated region
        $region21: #{tpu_custom_call.1} parent=11 // pred_check
          %p231 = pneg %p110
        $region22: #{tpu_custom_call.1} parent=11 // pred_check_branch
          %233 = sbr.rel (%p231) target = $region24
        $region23: #{tpu_custom_call.1} parent=11 // pred_region
          %235 = vsyncadd [#allocation6], 0
          %s236 = sshll.u32 %s3, 4
          %s237 = int_to_ptr.hbm [resolvable:$true] %s236
          %s238 = sshll.u32 [#allocation7], 4
          %s239 = int_to_ptr.vmem [resolvable:$true] %s238
          %244 = dma.hbm_to_vmem [thread:$0]  %s237, 1024, %s239, [#allocation6], 64, 64, 4
        $region24: #{tpu_custom_call.1} parent=11 // pred_fallthru
          _
        // Predicated region
        $region25: #{tpu_custom_call.1} parent=11 // pred_check
          %p245 = pneg %p131
        $region26: #{tpu_custom_call.1} parent=11 // pred_check_branch
          %247 = sbr.rel (%p245) target = $region28
        $region27: #{tpu_custom_call.1} parent=11 // pred_region
          _
        $region28: #{tpu_custom_call.1} parent=11 // pred_fallthru
          _
        // Predicated region
        $region29: #{tpu_custom_call.1} parent=11 // pred_check
          %p248 = pneg %p152
        $region30: #{tpu_custom_call.1} parent=11 // pred_check_branch
          %250 = sbr.rel (%p248) target = $region32
        $region31: #{tpu_custom_call.1} parent=11 // pred_region
          %252 = vsyncadd [#allocation9], 0
          %s253 = sshll.u32 %s5, 4
          %s254 = int_to_ptr.hbm [resolvable:$true] %s253
          %s255 = sshll.u32 [#allocation8], 4
          %s256 = int_to_ptr.vmem [resolvable:$true] %s255
          %261 = dma.hbm_to_vmem [thread:$0]  %s254, 1024, %s256, [#allocation9], 64, 64, 4
        $region32: #{tpu_custom_call.1} parent=11 // pred_fallthru
          _
        // Predicated region
        $region33: #{tpu_custom_call.1} parent=11 // pred_check
          %p262 = pneg %p173
        $region34: #{tpu_custom_call.1} parent=11 // pred_check_branch
          %264 = sbr.rel (%p262) target = $region36
        $region35: #{tpu_custom_call.1} parent=11 // pred_region
          _
        $region36: #{tpu_custom_call.1} parent=11 // pred_fallthru
          _
      $region12: #{tpu_custom_call.1} parent=5 // pred_fallthru
        _
      %p265 = scmp.lt.s32.totalorder %s21, 2
      // Predicated region
      $region37: #{tpu_custom_call.1} parent=5 // pred_check
        %p266 = pneg %p265
      $region38: #{tpu_custom_call.1} parent=5 // pred_check_branch
        %268 = sbr.rel (%p266) target = $region40
      $region39: #{tpu_custom_call.1} parent=5 // pred_region
        // Predicated region
        $region41: #{tpu_custom_call.1} parent=39 // pred_check
          %p269 = pneg %p41
        $region42: #{tpu_custom_call.1} parent=39 // pred_check_branch
          %271 = sbr.rel (%p269) target = $region44
        $region43: #{tpu_custom_call.1} parent=39 // pred_region
          %s272 = sand.u32 %s31, 1
          %s273 = scalar_lea.sflag [#allocation3], %s272
          %s274 = sand.u32 %s31, 1
          %s275 = smul.addr %s274, 304
          %s276 = scalar_lea.vmem [#allocation2], %s275
          %s277 = smul.u32 38, %s21
          %s278 = ssub.s32 75, %s277
          %p279 = scmp.lt.s32.totalorder %s278, 38
          %s280 = scalar_select %p279, %s278, 38
          %s281 = smul.u32 8, %s280
          %s282 = ssub.s32 304, %s281
          %s283 = sshll.u32 %s282, 4
          %284 = vsyncadd %s273, %s283
          %p285 = scmp.ne.s32.totalorder 0, %s281
          %s286 = smul.addr %s277, 8
          %s287 = scalar_lea.hbm %s0, %s286
          %s288 = smul.u32 8, %s280
          %s289 = sshll.u32 %s287, 4
          %s290 = int_to_ptr.hbm [resolvable:$true] %s289
          %s291 = sshll.u32 %s276, 4
          %s292 = int_to_ptr.vmem [resolvable:$true] %s291
          %s293 = sshll.u32 %s288, 4
          %297 = dma.hbm_to_vmem [thread:$0]  (%p285), %s290, %s293, %s292, %s273, 128, 128, 8
        $region44: #{tpu_custom_call.1} parent=39 // pred_fallthru
          _
      $region40: #{tpu_custom_call.1} parent=5 // pred_fallthru
        _
      %p298 = scmp.le.s32.totalorder 1, %s21
      %p299 = scmp.lt.s32.totalorder %s21, 3
      %p300 = pnand %p298, %p299
      %p301 = pneg %p300
      // Predicated region
      $region45: #{tpu_custom_call.1} parent=5 // pred_check
        _
      $region46: #{tpu_custom_call.1} parent=5 // pred_check_branch
        %303 = sbr.rel (%p300) target = $region48
      $region47: #{tpu_custom_call.1} parent=5 // pred_region
        %s304 = ssub.s32 %s21, 1
        %s305 = sand.u32 %s34, 1
        %s306 = scalar_lea.sflag [#allocation3], %s305
        %s307 = sand.u32 %s34, 1
        %s308 = smul.addr %s307, 304
        %s309 = scalar_lea.vmem [#allocation2], %s308
        // Predicated region
        $region49: #{tpu_custom_call.1} parent=47 // pred_check
          %p310 = pneg %p47
        $region50: #{tpu_custom_call.1} parent=47 // pred_check_branch
          %312 = sbr.rel (%p310) target = $region52
        $region51: #{tpu_custom_call.1} parent=47 // pred_region
          %314 = dma.done %s306, 4864
        $region52: #{tpu_custom_call.1} parent=47 // pred_fallthru
          _
        // Predicated region
        $region53: #{tpu_custom_call.1} parent=47 // pred_check
          %p315 = pneg %p68
        $region54: #{tpu_custom_call.1} parent=47 // pred_check_branch
          %317 = sbr.rel (%p315) target = $region56
        $region55: #{tpu_custom_call.1} parent=47 // pred_region
          %319 = dma.done [#allocation6], 1024
        $region56: #{tpu_custom_call.1} parent=47 // pred_fallthru
          _
        // Predicated region
        $region57: #{tpu_custom_call.1} parent=47 // pred_check
          %p320 = pneg %p110
        $region58: #{tpu_custom_call.1} parent=47 // pred_check_branch
          %322 = sbr.rel (%p320) target = $region60
        $region59: #{tpu_custom_call.1} parent=47 // pred_region
          %324 = dma.done [#allocation6], 1024
        $region60: #{tpu_custom_call.1} parent=47 // pred_fallthru
          _
        // Predicated region
        $region61: #{tpu_custom_call.1} parent=47 // pred_check
          %p325 = pneg %p152
        $region62: #{tpu_custom_call.1} parent=47 // pred_check_branch
          %327 = sbr.rel (%p325) target = $region64
        $region63: #{tpu_custom_call.1} parent=47 // pred_region
          %329 = dma.done [#allocation9], 1024
        $region64: #{tpu_custom_call.1} parent=47 // pred_fallthru
          _
        %s330 = sand.u32 %s34, 1
        %s331 = scalar_lea.sflag [#allocation3], %s330
        %s332 = sand.u32 %s34, 1
        %s333 = smul.addr %s332, 304
        %s334 = scalar_lea.vmem [#allocation2], %s333
        %p335 = pneg %p47
        %p336 = pneg %p44
        %p337 = pneg %p68
        %p338 = pneg %p65
        %p339 = pneg %p89
        %p340 = pneg %p86
        %p341 = pneg %p110
        %p342 = pneg %p107
        %p343 = pneg %p131
        %p344 = pneg %p128
        %p345 = pneg %p152
        %p346 = pneg %p149
        %p347 = pneg %p173
        %p348 = pneg %p170
        %p349 = pneg %p199
        %p350 = pneg %p196
        %s351 = sand.u32 %s186, 1
        %s352 = scalar_lea.sflag [#allocation4], %s351
        %s353 = sand.u32 %s186, 1
        %s354 = smul.addr %s353, 304
        %s355 = scalar_lea.vmem [#allocation10], %s354
        %s356 = smul.u32 38, %s26
        %s357 = ssub.s32 75, %s356
        %p358 = scmp.lt.s32.totalorder %s357, 38
        %s359 = scalar_select %p358, %s357, 38
        %s360 = smul.u32 8, %s359
        %s361 = smul.u32 38, %s26
        %s362 = ssub.s32 75, %s361
        %p363 = scmp.lt.s32.totalorder %s362, 38
        %s364 = scalar_select %p363, %s362, 38
        %s365 = smul.u32 8, %s364
        %v366 = vld [vmem:[%s309] sm:$0xff]
        %v367 = vld [vmem:[%s309 + $0x8] sm:$0xff]
        %v368 = vld [vmem:[%s309 + $0x10] sm:$0xff]
        %v369 = vld [vmem:[%s309 + $0x18] sm:$0xff]
        %v370 = vld [vmem:[%s309 + $0x20] sm:$0xff]
        %v371 = vld [vmem:[%s309 + $0x28] sm:$0xff]
        %v372 = vld [vmem:[%s309 + $0x30] sm:$0xff]
        %v373 = vld [vmem:[%s309 + $0x38] sm:$0xff]
        %v374 = vld [vmem:[%s309 + $0x40] sm:$0xff]
        %v375 = vld [vmem:[%s309 + $0x48] sm:$0xff]
        %v376 = vld [vmem:[%s309 + $0x50] sm:$0xff]
        %v377 = vld [vmem:[%s309 + $0x58] sm:$0xff]
        %v378 = vld [vmem:[%s309 + $0x60] sm:$0xff]
        %v379 = vld [vmem:[%s309 + $0x68] sm:$0xff]
        %v380 = vld [vmem:[%s309 + $0x70] sm:$0xff]
        %v381 = vld [vmem:[%s309 + $0x78] sm:$0xff]
        %v382 = vld [vmem:[%s309 + $0x80] sm:$0xff]
        %v383 = vld [vmem:[%s309 + $0x88] sm:$0xff]
        %v384 = vld [vmem:[%s309 + $0x90] sm:$0xff]
        %v385 = vld [vmem:[%s309 + $0x98] sm:$0xff]
        %v386 = vld [vmem:[%s309 + $0xa0] sm:$0xff]
        %v387 = vld [vmem:[%s309 + $0xa8] sm:$0xff]
        %v388 = vld [vmem:[%s309 + $0xb0] sm:$0xff]
        %v389 = vld [vmem:[%s309 + $0xb8] sm:$0xff]
        %v390 = vld [vmem:[%s309 + $0xc0] sm:$0xff]
        %v391 = vld [vmem:[%s309 + $0xc8] sm:$0xff]
        %v392 = vld [vmem:[%s309 + $0xd0] sm:$0xff]
        %v393 = vld [vmem:[%s309 + $0xd8] sm:$0xff]
        %v394 = vld [vmem:[%s309 + $0xe0] sm:$0xff]
        %v395 = vld [vmem:[%s309 + $0xe8] sm:$0xff]
        %v396 = vld [vmem:[%s309 + $0xf0] sm:$0xff]
        %v397 = vld [vmem:[%s309 + $0xf8] sm:$0xff]
        %v398 = vld [vmem:[%s309 + $0x100] sm:$0xff]
        %v399 = vld [vmem:[%s309 + $0x108] sm:$0xff]
        %v400 = vld [vmem:[%s309 + $0x110] sm:$0xff]
        %v401 = vld [vmem:[%s309 + $0x118] sm:$0xff]
        %v402 = vld [vmem:[%s309 + $0x120] sm:$0xff]
        %v403 = vld [vmem:[%s309 + $0x128] sm:$0xff]
        %v404 = vpack.c.bf16 %v367, %v366
        %v405 = vpack.c.bf16 %v369, %v368
        %v406 = vpack.c.bf16 %v371, %v370
        %v407 = vpack.c.bf16 %v373, %v372
        %v408 = vpack.c.bf16 %v375, %v374
        %v409 = vpack.c.bf16 %v377, %v376
        %v410 = vpack.c.bf16 %v379, %v378
        %v411 = vpack.c.bf16 %v381, %v380
        %v412 = vpack.c.bf16 %v383, %v382
        %v413 = vpack.c.bf16 %v385, %v384
        %v414 = vpack.c.bf16 %v387, %v386
        %v415 = vpack.c.bf16 %v389, %v388
        %v416 = vpack.c.bf16 %v391, %v390
        %v417 = vpack.c.bf16 %v393, %v392
        %v418 = vpack.c.bf16 %v395, %v394
        %v419 = vpack.c.bf16 %v397, %v396
        %v420 = vpack.c.bf16 %v399, %v398
        %v421 = vpack.c.bf16 %v401, %v400
        %v422 = vpack.c.bf16 %v403, %v402
        %v423 = vld [vmem:[#allocation5] sm:$0xf]
        %v424 = vld [vmem:[#allocation5 + $0x4] sm:$0xf]
        %v425 = vld [vmem:[#allocation5 + $0x8] sm:$0xf]
        %v426 = vld [vmem:[#allocation5 + $0xc] sm:$0xf]
        %v427 = vld [vmem:[#allocation5 + $0x10] sm:$0xf]
        %v428 = vld [vmem:[#allocation5 + $0x14] sm:$0xf]
        %v429 = vld [vmem:[#allocation5 + $0x18] sm:$0xf]
        %v430 = vld [vmem:[#allocation5 + $0x1c] sm:$0xf]
        %v431 = vld [vmem:[#allocation5 + $0x20] sm:$0xf]
        %v432 = vld [vmem:[#allocation5 + $0x24] sm:$0xf]
        %v433 = vld [vmem:[#allocation5 + $0x28] sm:$0xf]
        %v434 = vld [vmem:[#allocation5 + $0x2c] sm:$0xf]
        %v435 = vld [vmem:[#allocation5 + $0x30] sm:$0xf]
        %v436 = vld [vmem:[#allocation5 + $0x34] sm:$0xf]
        %v437 = vld [vmem:[#allocation5 + $0x38] sm:$0xf]
        %v438 = vld [vmem:[#allocation5 + $0x3c] sm:$0xf]
        %v439 = vld [vmem:[%s2] sm:$0x1]
        %v441 = vperm.slane %v439, 0
        %v459 = vunpack.c.l.b16 %v423
        %v460 = vunpack.c.l.b16 %v424
        %v461 = vunpack.c.l.b16 %v425
        %v462 = vunpack.c.l.b16 %v426
        %v463 = vunpack.c.l.b16 %v427
        %v464 = vunpack.c.l.b16 %v428
        %v465 = vunpack.c.l.b16 %v429
        %v466 = vunpack.c.l.b16 %v430
        %v467 = vunpack.c.l.b16 %v431
        %v468 = vunpack.c.l.b16 %v432
        %v469 = vunpack.c.l.b16 %v433
        %v470 = vunpack.c.l.b16 %v434
        %v471 = vunpack.c.l.b16 %v435
        %v472 = vunpack.c.l.b16 %v436
        %v473 = vunpack.c.l.b16 %v437
        %v474 = vunpack.c.l.b16 %v438
        %v475 = vpack.c.b16 %v460, %v459
        %v476 = vpack.c.b16 %v462, %v461
        %v477 = vpack.c.b16 %v464, %v463
        %v478 = vpack.c.b16 %v466, %v465
        %v479 = vpack.c.b16 %v468, %v467
        %v480 = vpack.c.b16 %v470, %v469
        %v481 = vpack.c.b16 %v472, %v471
        %v482 = vpack.c.b16 %v474, %v473
        %491 = vmatpush.bf16.msra.mxu0 %v482
        %492 = vmatpush.bf16.msra.mxu0 %v481
        %493 = vmatpush.bf16.msra.mxu0 %v480
        %494 = vmatpush.bf16.msra.mxu0 %v479
        %495 = vmatpush.bf16.msra.mxu0 %v478
        %496 = vmatpush.bf16.msra.mxu0 %v477
        %497 = vmatpush.bf16.msra.mxu0 %v476
        %498 = vmatpush.bf16.msra.mxu0 %v475
        %499 = vmatmul.bf16.gmra.mxu0 %v404
        %v500 = vpop.f32.mrf.mxu0
        %v501 = vadd.f32 %v441, %v500
        %v502 = vpop.f32.mrf.mxu0
        %v503 = vadd.f32 %v441, %v502
        %504 = vmatmul.bf16.gmra.mxu0 %v405
        %v505 = vpop.f32.mrf.mxu0
        %v506 = vadd.f32 %v441, %v505
        %v507 = vpop.f32.mrf.mxu0
        %v508 = vadd.f32 %v441, %v507
        %509 = vmatmul.bf16.gmra.mxu0 %v406
        %v510 = vpop.f32.mrf.mxu0
        %v511 = vadd.f32 %v441, %v510
        %v512 = vpop.f32.mrf.mxu0
        %v513 = vadd.f32 %v441, %v512
        %514 = vmatmul.bf16.gmra.mxu0 %v407
        %v515 = vpop.f32.mrf.mxu0
        %v516 = vadd.f32 %v441, %v515
        %v517 = vpop.f32.mrf.mxu0
        %v518 = vadd.f32 %v441, %v517
        %519 = vmatmul.bf16.gmra.mxu0 %v408
        %v520 = vpop.f32.mrf.mxu0
        %v521 = vadd.f32 %v441, %v520
        %v522 = vpop.f32.mrf.mxu0
        %v523 = vadd.f32 %v441, %v522
        %524 = vmatmul.bf16.gmra.mxu0 %v409
        %v525 = vpop.f32.mrf.mxu0
        %v526 = vadd.f32 %v441, %v525
        %v527 = vpop.f32.mrf.mxu0
        %v528 = vadd.f32 %v441, %v527
        %529 = vmatmul.bf16.gmra.mxu0 %v410
        %v530 = vpop.f32.mrf.mxu0
        %v531 = vadd.f32 %v441, %v530
        %v532 = vpop.f32.mrf.mxu0
        %v533 = vadd.f32 %v441, %v532
        %534 = vmatmul.bf16.gmra.mxu0 %v411
        %v535 = vpop.f32.mrf.mxu0
        %v536 = vadd.f32 %v441, %v535
        %v537 = vpop.f32.mrf.mxu0
        %v538 = vadd.f32 %v441, %v537
        %539 = vmatmul.bf16.gmra.mxu0 %v412
        %v540 = vpop.f32.mrf.mxu0
        %v541 = vadd.f32 %v441, %v540
        %v542 = vpop.f32.mrf.mxu0
        %v543 = vadd.f32 %v441, %v542
        %544 = vmatmul.bf16.gmra.mxu0 %v413
        %v545 = vpop.f32.mrf.mxu0
        %v546 = vadd.f32 %v441, %v545
        %v547 = vpop.f32.mrf.mxu0
        %v548 = vadd.f32 %v441, %v547
        %549 = vmatmul.bf16.gmra.mxu0 %v414
        %v550 = vpop.f32.mrf.mxu0
        %v551 = vadd.f32 %v441, %v550
        %v552 = vpop.f32.mrf.mxu0
        %v553 = vadd.f32 %v441, %v552
        %554 = vmatmul.bf16.gmra.mxu0 %v415
        %v555 = vpop.f32.mrf.mxu0
        %v556 = vadd.f32 %v441, %v555
        %v557 = vpop.f32.mrf.mxu0
        %v558 = vadd.f32 %v441, %v557
        %559 = vmatmul.bf16.gmra.mxu0 %v416
        %v560 = vpop.f32.mrf.mxu0
        %v561 = vadd.f32 %v441, %v560
        %v562 = vpop.f32.mrf.mxu0
        %v563 = vadd.f32 %v441, %v562
        %564 = vmatmul.bf16.gmra.mxu0 %v417
        %v565 = vpop.f32.mrf.mxu0
        %v566 = vadd.f32 %v441, %v565
        %v567 = vpop.f32.mrf.mxu0
        %v568 = vadd.f32 %v441, %v567
        %569 = vmatmul.bf16.gmra.mxu0 %v418
        %v570 = vpop.f32.mrf.mxu0
        %v571 = vadd.f32 %v441, %v570
        %v572 = vpop.f32.mrf.mxu0
        %v573 = vadd.f32 %v441, %v572
        %574 = vmatmul.bf16.gmra.mxu0 %v419
        %v575 = vpop.f32.mrf.mxu0
        %v576 = vadd.f32 %v441, %v575
        %v577 = vpop.f32.mrf.mxu0
        %v578 = vadd.f32 %v441, %v577
        %579 = vmatmul.bf16.gmra.mxu0 %v420
        %v580 = vpop.f32.mrf.mxu0
        %v581 = vadd.f32 %v441, %v580
        %v582 = vpop.f32.mrf.mxu0
        %v583 = vadd.f32 %v441, %v582
        %584 = vmatmul.bf16.gmra.mxu0 %v421
        %v585 = vpop.f32.mrf.mxu0
        %v586 = vadd.f32 %v441, %v585
        %v587 = vpop.f32.mrf.mxu0
        %v588 = vadd.f32 %v441, %v587
        %589 = vmatmul.bf16.gmra.mxu0 %v422
        %v590 = vpop.f32.mrf.mxu0
        %v591 = vadd.f32 %v441, %v590
        %v592 = vpop.f32.mrf.mxu0
        %v593 = vadd.f32 %v441, %v592
        %594 = vdwg.mxu0
        %v595 = vmax.f32 %v501, 0.0
        %v596 = vmax.f32 %v503, 0.0
        %v597 = vmax.f32 %v506, 0.0
        %v598 = vmax.f32 %v508, 0.0
        %v599 = vmax.f32 %v511, 0.0
        %v600 = vmax.f32 %v513, 0.0
        %v601 = vmax.f32 %v516, 0.0
        %v602 = vmax.f32 %v518, 0.0
        %v603 = vmax.f32 %v521, 0.0
        %v604 = vmax.f32 %v523, 0.0
        %v605 = vmax.f32 %v526, 0.0
        %v606 = vmax.f32 %v528, 0.0
        %v607 = vmax.f32 %v531, 0.0
        %v608 = vmax.f32 %v533, 0.0
        %v609 = vmax.f32 %v536, 0.0
        %v610 = vmax.f32 %v538, 0.0
        %v611 = vmax.f32 %v541, 0.0
        %v612 = vmax.f32 %v543, 0.0
        %v613 = vmax.f32 %v546, 0.0
        %v614 = vmax.f32 %v548, 0.0
        %v615 = vmax.f32 %v551, 0.0
        %v616 = vmax.f32 %v553, 0.0
        %v617 = vmax.f32 %v556, 0.0
        %v618 = vmax.f32 %v558, 0.0
        %v619 = vmax.f32 %v561, 0.0
        %v620 = vmax.f32 %v563, 0.0
        %v621 = vmax.f32 %v566, 0.0
        %v622 = vmax.f32 %v568, 0.0
        %v623 = vmax.f32 %v571, 0.0
        %v624 = vmax.f32 %v573, 0.0
        %v625 = vmax.f32 %v576, 0.0
        %v626 = vmax.f32 %v578, 0.0
        %v627 = vmax.f32 %v581, 0.0
        %v628 = vmax.f32 %v583, 0.0
        %v629 = vmax.f32 %v586, 0.0
        %v630 = vmax.f32 %v588, 0.0
        %v631 = vmax.f32 %v591, 0.0
        %v632 = vmax.f32 %v593, 0.0
        %v633 = vpack.c.bf16 %v596, %v595
        %v634 = vpack.c.bf16 %v598, %v597
        %v635 = vpack.c.bf16 %v600, %v599
        %v636 = vpack.c.bf16 %v602, %v601
        %v637 = vpack.c.bf16 %v604, %v603
        %v638 = vpack.c.bf16 %v606, %v605
        %v639 = vpack.c.bf16 %v608, %v607
        %v640 = vpack.c.bf16 %v610, %v609
        %v641 = vpack.c.bf16 %v612, %v611
        %v642 = vpack.c.bf16 %v614, %v613
        %v643 = vpack.c.bf16 %v616, %v615
        %v644 = vpack.c.bf16 %v618, %v617
        %v645 = vpack.c.bf16 %v620, %v619
        %v646 = vpack.c.bf16 %v622, %v621
        %v647 = vpack.c.bf16 %v624, %v623
        %v648 = vpack.c.bf16 %v626, %v625
        %v649 = vpack.c.bf16 %v628, %v627
        %v650 = vpack.c.bf16 %v630, %v629
        %v651 = vpack.c.bf16 %v632, %v631
        %v652 = vld [vmem:[#allocation7] sm:$0xf]
        %v653 = vld [vmem:[#allocation7 + $0x4] sm:$0xf]
        %v654 = vld [vmem:[#allocation7 + $0x8] sm:$0xf]
        %v655 = vld [vmem:[#allocation7 + $0xc] sm:$0xf]
        %v656 = vld [vmem:[#allocation7 + $0x10] sm:$0xf]
        %v657 = vld [vmem:[#allocation7 + $0x14] sm:$0xf]
        %v658 = vld [vmem:[#allocation7 + $0x18] sm:$0xf]
        %v659 = vld [vmem:[#allocation7 + $0x1c] sm:$0xf]
        %v660 = vld [vmem:[#allocation7 + $0x20] sm:$0xf]
        %v661 = vld [vmem:[#allocation7 + $0x24] sm:$0xf]
        %v662 = vld [vmem:[#allocation7 + $0x28] sm:$0xf]
        %v663 = vld [vmem:[#allocation7 + $0x2c] sm:$0xf]
        %v664 = vld [vmem:[#allocation7 + $0x30] sm:$0xf]
        %v665 = vld [vmem:[#allocation7 + $0x34] sm:$0xf]
        %v666 = vld [vmem:[#allocation7 + $0x38] sm:$0xf]
        %v667 = vld [vmem:[#allocation7 + $0x3c] sm:$0xf]
        %v668 = vld [vmem:[%s4] sm:$0x1]
        %v670 = vperm.slane %v668, 0
        %v688 = vunpack.c.l.b16 %v652
        %v689 = vunpack.c.l.b16 %v653
        %v690 = vunpack.c.l.b16 %v654
        %v691 = vunpack.c.l.b16 %v655
        %v692 = vunpack.c.l.b16 %v656
        %v693 = vunpack.c.l.b16 %v657
        %v694 = vunpack.c.l.b16 %v658
        %v695 = vunpack.c.l.b16 %v659
        %v696 = vunpack.c.l.b16 %v660
        %v697 = vunpack.c.l.b16 %v661
        %v698 = vunpack.c.l.b16 %v662
        %v699 = vunpack.c.l.b16 %v663
        %v700 = vunpack.c.l.b16 %v664
        %v701 = vunpack.c.l.b16 %v665
        %v702 = vunpack.c.l.b16 %v666
        %v703 = vunpack.c.l.b16 %v667
        %v704 = vpack.c.b16 %v689, %v688
        %v705 = vpack.c.b16 %v691, %v690
        %v706 = vpack.c.b16 %v693, %v692
        %v707 = vpack.c.b16 %v695, %v694
        %v708 = vpack.c.b16 %v697, %v696
        %v709 = vpack.c.b16 %v699, %v698
        %v710 = vpack.c.b16 %v701, %v700
        %v711 = vpack.c.b16 %v703, %v702
        %720 = vmatpush.bf16.msra.mxu0 %v711
        %721 = vmatpush.bf16.msra.mxu0 %v710
        %722 = vmatpush.bf16.msra.mxu0 %v709
        %723 = vmatpush.bf16.msra.mxu0 %v708
        %724 = vmatpush.bf16.msra.mxu0 %v707
        %725 = vmatpush.bf16.msra.mxu0 %v706
        %726 = vmatpush.bf16.msra.mxu0 %v705
        %727 = vmatpush.bf16.msra.mxu0 %v704
        %728 = vmatmul.bf16.gmra.mxu0 %v633
        %v729 = vpop.f32.mrf.mxu0
        %v730 = vadd.f32 %v670, %v729
        %v731 = vpop.f32.mrf.mxu0
        %v732 = vadd.f32 %v670, %v731
        %733 = vmatmul.bf16.gmra.mxu0 %v634
        %v734 = vpop.f32.mrf.mxu0
        %v735 = vadd.f32 %v670, %v734
        %v736 = vpop.f32.mrf.mxu0
        %v737 = vadd.f32 %v670, %v736
        %738 = vmatmul.bf16.gmra.mxu0 %v635
        %v739 = vpop.f32.mrf.mxu0
        %v740 = vadd.f32 %v670, %v739
        %v741 = vpop.f32.mrf.mxu0
        %v742 = vadd.f32 %v670, %v741
        %743 = vmatmul.bf16.gmra.mxu0 %v636
        %v744 = vpop.f32.mrf.mxu0
        %v745 = vadd.f32 %v670, %v744
        %v746 = vpop.f32.mrf.mxu0
        %v747 = vadd.f32 %v670, %v746
        %748 = vmatmul.bf16.gmra.mxu0 %v637
        %v749 = vpop.f32.mrf.mxu0
        %v750 = vadd.f32 %v670, %v749
        %v751 = vpop.f32.mrf.mxu0
        %v752 = vadd.f32 %v670, %v751
        %753 = vmatmul.bf16.gmra.mxu0 %v638
        %v754 = vpop.f32.mrf.mxu0
        %v755 = vadd.f32 %v670, %v754
        %v756 = vpop.f32.mrf.mxu0
        %v757 = vadd.f32 %v670, %v756
        %758 = vmatmul.bf16.gmra.mxu0 %v639
        %v759 = vpop.f32.mrf.mxu0
        %v760 = vadd.f32 %v670, %v759
        %v761 = vpop.f32.mrf.mxu0
        %v762 = vadd.f32 %v670, %v761
        %763 = vmatmul.bf16.gmra.mxu0 %v640
        %v764 = vpop.f32.mrf.mxu0
        %v765 = vadd.f32 %v670, %v764
        %v766 = vpop.f32.mrf.mxu0
        %v767 = vadd.f32 %v670, %v766
        %768 = vmatmul.bf16.gmra.mxu0 %v641
        %v769 = vpop.f32.mrf.mxu0
        %v770 = vadd.f32 %v670, %v769
        %v771 = vpop.f32.mrf.mxu0
        %v772 = vadd.f32 %v670, %v771
        %773 = vmatmul.bf16.gmra.mxu0 %v642
        %v774 = vpop.f32.mrf.mxu0
        %v775 = vadd.f32 %v670, %v774
        %v776 = vpop.f32.mrf.mxu0
        %v777 = vadd.f32 %v670, %v776
        %778 = vmatmul.bf16.gmra.mxu0 %v643
        %v779 = vpop.f32.mrf.mxu0
        %v780 = vadd.f32 %v670, %v779
        %v781 = vpop.f32.mrf.mxu0
        %v782 = vadd.f32 %v670, %v781
        %783 = vmatmul.bf16.gmra.mxu0 %v644
        %v784 = vpop.f32.mrf.mxu0
        %v785 = vadd.f32 %v670, %v784
        %v786 = vpop.f32.mrf.mxu0
        %v787 = vadd.f32 %v670, %v786
        %788 = vmatmul.bf16.gmra.mxu0 %v645
        %v789 = vpop.f32.mrf.mxu0
        %v790 = vadd.f32 %v670, %v789
        %v791 = vpop.f32.mrf.mxu0
        %v792 = vadd.f32 %v670, %v791
        %793 = vmatmul.bf16.gmra.mxu0 %v646
        %v794 = vpop.f32.mrf.mxu0
        %v795 = vadd.f32 %v670, %v794
        %v796 = vpop.f32.mrf.mxu0
        %v797 = vadd.f32 %v670, %v796
        %798 = vmatmul.bf16.gmra.mxu0 %v647
        %v799 = vpop.f32.mrf.mxu0
        %v800 = vadd.f32 %v670, %v799
        %v801 = vpop.f32.mrf.mxu0
        %v802 = vadd.f32 %v670, %v801
        %803 = vmatmul.bf16.gmra.mxu0 %v648
        %v804 = vpop.f32.mrf.mxu0
        %v805 = vadd.f32 %v670, %v804
        %v806 = vpop.f32.mrf.mxu0
        %v807 = vadd.f32 %v670, %v806
        %808 = vmatmul.bf16.gmra.mxu0 %v649
        %v809 = vpop.f32.mrf.mxu0
        %v810 = vadd.f32 %v670, %v809
        %v811 = vpop.f32.mrf.mxu0
        %v812 = vadd.f32 %v670, %v811
        %813 = vmatmul.bf16.gmra.mxu0 %v650
        %v814 = vpop.f32.mrf.mxu0
        %v815 = vadd.f32 %v670, %v814
        %v816 = vpop.f32.mrf.mxu0
        %v817 = vadd.f32 %v670, %v816
        %818 = vmatmul.bf16.gmra.mxu0 %v651
        %v819 = vpop.f32.mrf.mxu0
        %v820 = vadd.f32 %v670, %v819
        %v821 = vpop.f32.mrf.mxu0
        %v822 = vadd.f32 %v670, %v821
        %823 = vdwg.mxu0
        %v824 = vmax.f32 %v730, 0.0
        %v825 = vmax.f32 %v732, 0.0
        %v826 = vmax.f32 %v735, 0.0
        %v827 = vmax.f32 %v737, 0.0
        %v828 = vmax.f32 %v740, 0.0
        %v829 = vmax.f32 %v742, 0.0
        %v830 = vmax.f32 %v745, 0.0
        %v831 = vmax.f32 %v747, 0.0
        %v832 = vmax.f32 %v750, 0.0
        %v833 = vmax.f32 %v752, 0.0
        %v834 = vmax.f32 %v755, 0.0
        %v835 = vmax.f32 %v757, 0.0
        %v836 = vmax.f32 %v760, 0.0
        %v837 = vmax.f32 %v762, 0.0
        %v838 = vmax.f32 %v765, 0.0
        %v839 = vmax.f32 %v767, 0.0
        %v840 = vmax.f32 %v770, 0.0
        %v841 = vmax.f32 %v772, 0.0
        %v842 = vmax.f32 %v775, 0.0
        %v843 = vmax.f32 %v777, 0.0
        %v844 = vmax.f32 %v780, 0.0
        %v845 = vmax.f32 %v782, 0.0
        %v846 = vmax.f32 %v785, 0.0
        %v847 = vmax.f32 %v787, 0.0
        %v848 = vmax.f32 %v790, 0.0
        %v849 = vmax.f32 %v792, 0.0
        %v850 = vmax.f32 %v795, 0.0
        %v851 = vmax.f32 %v797, 0.0
        %v852 = vmax.f32 %v800, 0.0
        %v853 = vmax.f32 %v802, 0.0
        %v854 = vmax.f32 %v805, 0.0
        %v855 = vmax.f32 %v807, 0.0
        %v856 = vmax.f32 %v810, 0.0
        %v857 = vmax.f32 %v812, 0.0
        %v858 = vmax.f32 %v815, 0.0
        %v859 = vmax.f32 %v817, 0.0
        %v860 = vmax.f32 %v820, 0.0
        %v861 = vmax.f32 %v822, 0.0
        %v862 = vpack.c.bf16 %v825, %v824
        %v863 = vpack.c.bf16 %v827, %v826
        %v864 = vpack.c.bf16 %v829, %v828
        %v865 = vpack.c.bf16 %v831, %v830
        %v866 = vpack.c.bf16 %v833, %v832
        %v867 = vpack.c.bf16 %v835, %v834
        %v868 = vpack.c.bf16 %v837, %v836
        %v869 = vpack.c.bf16 %v839, %v838
        %v870 = vpack.c.bf16 %v841, %v840
        %v871 = vpack.c.bf16 %v843, %v842
        %v872 = vpack.c.bf16 %v845, %v844
        %v873 = vpack.c.bf16 %v847, %v846
        %v874 = vpack.c.bf16 %v849, %v848
        %v875 = vpack.c.bf16 %v851, %v850
        %v876 = vpack.c.bf16 %v853, %v852
        %v877 = vpack.c.bf16 %v855, %v854
        %v878 = vpack.c.bf16 %v857, %v856
        %v879 = vpack.c.bf16 %v859, %v858
        %v880 = vpack.c.bf16 %v861, %v860
        %v881 = vld [vmem:[#allocation8] sm:$0xf]
        %v882 = vld [vmem:[#allocation8 + $0x4] sm:$0xf]
        %v883 = vld [vmem:[#allocation8 + $0x8] sm:$0xf]
        %v884 = vld [vmem:[#allocation8 + $0xc] sm:$0xf]
        %v885 = vld [vmem:[#allocation8 + $0x10] sm:$0xf]
        %v886 = vld [vmem:[#allocation8 + $0x14] sm:$0xf]
        %v887 = vld [vmem:[#allocation8 + $0x18] sm:$0xf]
        %v888 = vld [vmem:[#allocation8 + $0x1c] sm:$0xf]
        %v889 = vld [vmem:[#allocation8 + $0x20] sm:$0xf]
        %v890 = vld [vmem:[#allocation8 + $0x24] sm:$0xf]
        %v891 = vld [vmem:[#allocation8 + $0x28] sm:$0xf]
        %v892 = vld [vmem:[#allocation8 + $0x2c] sm:$0xf]
        %v893 = vld [vmem:[#allocation8 + $0x30] sm:$0xf]
        %v894 = vld [vmem:[#allocation8 + $0x34] sm:$0xf]
        %v895 = vld [vmem:[#allocation8 + $0x38] sm:$0xf]
        %v896 = vld [vmem:[#allocation8 + $0x3c] sm:$0xf]
        %v897 = vld [vmem:[%s6] sm:$0x1]
        %v899 = vperm.slane %v897, 0
        %v917 = vunpack.c.l.b16 %v881
        %v918 = vunpack.c.l.b16 %v882
        %v919 = vunpack.c.l.b16 %v883
        %v920 = vunpack.c.l.b16 %v884
        %v921 = vunpack.c.l.b16 %v885
        %v922 = vunpack.c.l.b16 %v886
        %v923 = vunpack.c.l.b16 %v887
        %v924 = vunpack.c.l.b16 %v888
        %v925 = vunpack.c.l.b16 %v889
        %v926 = vunpack.c.l.b16 %v890
        %v927 = vunpack.c.l.b16 %v891
        %v928 = vunpack.c.l.b16 %v892
        %v929 = vunpack.c.l.b16 %v893
        %v930 = vunpack.c.l.b16 %v894
        %v931 = vunpack.c.l.b16 %v895
        %v932 = vunpack.c.l.b16 %v896
        %v933 = vpack.c.b16 %v918, %v917
        %v934 = vpack.c.b16 %v920, %v919
        %v935 = vpack.c.b16 %v922, %v921
        %v936 = vpack.c.b16 %v924, %v923
        %v937 = vpack.c.b16 %v926, %v925
        %v938 = vpack.c.b16 %v928, %v927
        %v939 = vpack.c.b16 %v930, %v929
        %v940 = vpack.c.b16 %v932, %v931
        %949 = vmatpush.bf16.msra.mxu0 %v940
        %950 = vmatpush.bf16.msra.mxu0 %v939
        %951 = vmatpush.bf16.msra.mxu0 %v938
        %952 = vmatpush.bf16.msra.mxu0 %v937
        %953 = vmatpush.bf16.msra.mxu0 %v936
        %954 = vmatpush.bf16.msra.mxu0 %v935
        %955 = vmatpush.bf16.msra.mxu0 %v934
        %956 = vmatpush.bf16.msra.mxu0 %v933
        %957 = vmatmul.bf16.gmra.mxu0 %v862
        %v958 = vpop.f32.mrf.mxu0
        %v959 = vadd.f32 %v899, %v958
        %v960 = vpop.f32.mrf.mxu0
        %v961 = vadd.f32 %v899, %v960
        %962 = vmatmul.bf16.gmra.mxu0 %v863
        %v963 = vpop.f32.mrf.mxu0
        %v964 = vadd.f32 %v899, %v963
        %v965 = vpop.f32.mrf.mxu0
        %v966 = vadd.f32 %v899, %v965
        %967 = vmatmul.bf16.gmra.mxu0 %v864
        %v968 = vpop.f32.mrf.mxu0
        %v969 = vadd.f32 %v899, %v968
        %v970 = vpop.f32.mrf.mxu0
        %v971 = vadd.f32 %v899, %v970
        %972 = vmatmul.bf16.gmra.mxu0 %v865
        %v973 = vpop.f32.mrf.mxu0
        %v974 = vadd.f32 %v899, %v973
        %v975 = vpop.f32.mrf.mxu0
        %v976 = vadd.f32 %v899, %v975
        %977 = vmatmul.bf16.gmra.mxu0 %v866
        %v978 = vpop.f32.mrf.mxu0
        %v979 = vadd.f32 %v899, %v978
        %v980 = vpop.f32.mrf.mxu0
        %v981 = vadd.f32 %v899, %v980
        %982 = vmatmul.bf16.gmra.mxu0 %v867
        %v983 = vpop.f32.mrf.mxu0
        %v984 = vadd.f32 %v899, %v983
        %v985 = vpop.f32.mrf.mxu0
        %v986 = vadd.f32 %v899, %v985
        %987 = vmatmul.bf16.gmra.mxu0 %v868
        %v988 = vpop.f32.mrf.mxu0
        %v989 = vadd.f32 %v899, %v988
        %v990 = vpop.f32.mrf.mxu0
        %v991 = vadd.f32 %v899, %v990
        %992 = vmatmul.bf16.gmra.mxu0 %v869
        %v993 = vpop.f32.mrf.mxu0
        %v994 = vadd.f32 %v899, %v993
        %v995 = vpop.f32.mrf.mxu0
        %v996 = vadd.f32 %v899, %v995
        %997 = vmatmul.bf16.gmra.mxu0 %v870
        %v998 = vpop.f32.mrf.mxu0
        %v999 = vadd.f32 %v899, %v998
        %v1000 = vpop.f32.mrf.mxu0
        %v1001 = vadd.f32 %v899, %v1000
        %1002 = vmatmul.bf16.gmra.mxu0 %v871
        %v1003 = vpop.f32.mrf.mxu0
        %v1004 = vadd.f32 %v899, %v1003
        %v1005 = vpop.f32.mrf.mxu0
        %v1006 = vadd.f32 %v899, %v1005
        %1007 = vmatmul.bf16.gmra.mxu0 %v872
        %v1008 = vpop.f32.mrf.mxu0
        %v1009 = vadd.f32 %v899, %v1008
        %v1010 = vpop.f32.mrf.mxu0
        %v1011 = vadd.f32 %v899, %v1010
        %1012 = vmatmul.bf16.gmra.mxu0 %v873
        %v1013 = vpop.f32.mrf.mxu0
        %v1014 = vadd.f32 %v899, %v1013
        %v1015 = vpop.f32.mrf.mxu0
        %v1016 = vadd.f32 %v899, %v1015
        %1017 = vmatmul.bf16.gmra.mxu0 %v874
        %v1018 = vpop.f32.mrf.mxu0
        %v1019 = vadd.f32 %v899, %v1018
        %v1020 = vpop.f32.mrf.mxu0
        %v1021 = vadd.f32 %v899, %v1020
        %1022 = vmatmul.bf16.gmra.mxu0 %v875
        %v1023 = vpop.f32.mrf.mxu0
        %v1024 = vadd.f32 %v899, %v1023
        %v1025 = vpop.f32.mrf.mxu0
        %v1026 = vadd.f32 %v899, %v1025
        %1027 = vmatmul.bf16.gmra.mxu0 %v876
        %v1028 = vpop.f32.mrf.mxu0
        %v1029 = vadd.f32 %v899, %v1028
        %v1030 = vpop.f32.mrf.mxu0
        %v1031 = vadd.f32 %v899, %v1030
        %1032 = vmatmul.bf16.gmra.mxu0 %v877
        %v1033 = vpop.f32.mrf.mxu0
        %v1034 = vadd.f32 %v899, %v1033
        %v1035 = vpop.f32.mrf.mxu0
        %v1036 = vadd.f32 %v899, %v1035
        %1037 = vmatmul.bf16.gmra.mxu0 %v878
        %v1038 = vpop.f32.mrf.mxu0
        %v1039 = vadd.f32 %v899, %v1038
        %v1040 = vpop.f32.mrf.mxu0
        %v1041 = vadd.f32 %v899, %v1040
        %1042 = vmatmul.bf16.gmra.mxu0 %v879
        %v1043 = vpop.f32.mrf.mxu0
        %v1044 = vadd.f32 %v899, %v1043
        %v1045 = vpop.f32.mrf.mxu0
        %v1046 = vadd.f32 %v899, %v1045
        %1047 = vmatmul.bf16.gmra.mxu0 %v880
        %v1048 = vpop.f32.mrf.mxu0
        %v1049 = vadd.f32 %v899, %v1048
        %v1050 = vpop.f32.mrf.mxu0
        %v1051 = vadd.f32 %v899, %v1050
        %1052 = vdwg.mxu0
        %1053 = vst [vmem:[%s355] sm:$0xff] %v959
        %1054 = vst [vmem:[%s355 + $0x8] sm:$0xff] %v961
        %1055 = vst [vmem:[%s355 + $0x10] sm:$0xff] %v964
        %1056 = vst [vmem:[%s355 + $0x18] sm:$0xff] %v966
        %1057 = vst [vmem:[%s355 + $0x20] sm:$0xff] %v969
        %1058 = vst [vmem:[%s355 + $0x28] sm:$0xff] %v971
        %1059 = vst [vmem:[%s355 + $0x30] sm:$0xff] %v974
        %1060 = vst [vmem:[%s355 + $0x38] sm:$0xff] %v976
        %1061 = vst [vmem:[%s355 + $0x40] sm:$0xff] %v979
        %1062 = vst [vmem:[%s355 + $0x48] sm:$0xff] %v981
        %1063 = vst [vmem:[%s355 + $0x50] sm:$0xff] %v984
        %1064 = vst [vmem:[%s355 + $0x58] sm:$0xff] %v986
        %1065 = vst [vmem:[%s355 + $0x60] sm:$0xff] %v989
        %1066 = vst [vmem:[%s355 + $0x68] sm:$0xff] %v991
        %1067 = vst [vmem:[%s355 + $0x70] sm:$0xff] %v994
        %1068 = vst [vmem:[%s355 + $0x78] sm:$0xff] %v996
        %1069 = vst [vmem:[%s355 + $0x80] sm:$0xff] %v999
        %1070 = vst [vmem:[%s355 + $0x88] sm:$0xff] %v1001
        %1071 = vst [vmem:[%s355 + $0x90] sm:$0xff] %v1004
        %1072 = vst [vmem:[%s355 + $0x98] sm:$0xff] %v1006
        %1073 = vst [vmem:[%s355 + $0xa0] sm:$0xff] %v1009
        %1074 = vst [vmem:[%s355 + $0xa8] sm:$0xff] %v1011
        %1075 = vst [vmem:[%s355 + $0xb0] sm:$0xff] %v1014
        %1076 = vst [vmem:[%s355 + $0xb8] sm:$0xff] %v1016
        %1077 = vst [vmem:[%s355 + $0xc0] sm:$0xff] %v1019
        %1078 = vst [vmem:[%s355 + $0xc8] sm:$0xff] %v1021
        %1079 = vst [vmem:[%s355 + $0xd0] sm:$0xff] %v1024
        %1080 = vst [vmem:[%s355 + $0xd8] sm:$0xff] %v1026
        %1081 = vst [vmem:[%s355 + $0xe0] sm:$0xff] %v1029
        %1082 = vst [vmem:[%s355 + $0xe8] sm:$0xff] %v1031
        %1083 = vst [vmem:[%s355 + $0xf0] sm:$0xff] %v1034
        %1084 = vst [vmem:[%s355 + $0xf8] sm:$0xff] %v1036
        %1085 = vst [vmem:[%s355 + $0x100] sm:$0xff] %v1039
        %1086 = vst [vmem:[%s355 + $0x108] sm:$0xff] %v1041
        %1087 = vst [vmem:[%s355 + $0x110] sm:$0xff] %v1044
        %1088 = vst [vmem:[%s355 + $0x118] sm:$0xff] %v1046
        %1089 = vst [vmem:[%s355 + $0x120] sm:$0xff] %v1049
        %1090 = vst [vmem:[%s355 + $0x128] sm:$0xff] %v1051
        %s1091 = sand.u32 %s186, 1
        %s1092 = scalar_lea.sflag [#allocation4], %s1091
        %s1093 = sand.u32 %s186, 1
        %s1094 = smul.addr %s1093, 304
        %s1095 = scalar_lea.vmem [#allocation10], %s1094
        // Predicated region
        $region65: #{tpu_custom_call.1} parent=47 // pred_check
          %p1096 = pneg %p196
        $region66: #{tpu_custom_call.1} parent=47 // pred_check_branch
          %1098 = sbr.rel (%p1096) target = $region68
        $region67: #{tpu_custom_call.1} parent=47 // pred_region
          %s1099 = smul.u32 38, %s26
          %s1100 = ssub.s32 75, %s1099
          %p1101 = scmp.lt.s32.totalorder %s1100, 38
          %s1102 = scalar_select %p1101, %s1100, 38
          %s1103 = smul.u32 8, %s1102
          %s1104 = ssub.s32 304, %s1103
          %s1105 = sshll.u32 %s1104, 4
          %1106 = vsyncadd %s1092, %s1105
          %p1107 = scmp.ne.s32.totalorder 0, %s1103
          %s1108 = smul.addr %s1099, 8
          %s1109 = scalar_lea.hbm %s7, %s1108
          %s1110 = smul.u32 8, %s1102
          %s1111 = sshll.u32 %s1095, 4
          %s1112 = int_to_ptr.vmem [resolvable:$true] %s1111
          %s1113 = sshll.u32 %s1109, 4
          %s1114 = int_to_ptr.hbm [resolvable:$true] %s1113
          %s1115 = sshll.u32 %s1110, 4
          %1119 = dma.vmem_to_hbm [thread:$0]  (%p1107), %s1112, %s1115, %s1114, %s1092, 128, 128, 8
        $region68: #{tpu_custom_call.1} parent=47 // pred_fallthru
          _
      $region48: #{tpu_custom_call.1} parent=5 // pred_fallthru
        _
      %p1120 = scmp.le.s32.totalorder 2, %s21
      // Predicated region
      $region69: #{tpu_custom_call.1} parent=5 // pred_check
        %p1121 = pneg %p1120
      $region70: #{tpu_custom_call.1} parent=5 // pred_check_branch
        %1123 = sbr.rel (%p1121) target = $region72
      $region71: #{tpu_custom_call.1} parent=5 // pred_region
        %s1124 = ssub.s32 %s21, 2
        // Predicated region
        $region73: #{tpu_custom_call.1} parent=71 // pred_check
          %p1125 = pneg %p202
        $region74: #{tpu_custom_call.1} parent=71 // pred_check_branch
          %1127 = sbr.rel (%p1125) target = $region76
        $region75: #{tpu_custom_call.1} parent=71 // pred_region
          %s1128 = sand.u32 %s187, 1
          %s1129 = scalar_lea.sflag [#allocation4], %s1128
          %s1130 = sand.u32 %s187, 1
          %s1131 = smul.addr %s1130, 304
          %s1132 = scalar_lea.vmem [#allocation10], %s1131
          %1134 = dma.done %s1129, 4864
        $region76: #{tpu_custom_call.1} parent=71 // pred_fallthru
          _
      $region72: #{tpu_custom_call.1} parent=5 // pred_fallthru
        _
    $region6: #{tpu_custom_call.1} parent=1 // loop_footer
      %s25 = sadd.s32 1, %s21
    $region7: #{tpu_custom_call.1} parent=1 // loop_footer_branch
      %20 = sbr.rel target = $region3
    $region8: #{tpu_custom_call.1} parent=1 // loop_exit
      _
    %1135 = vsyncpa [#allocation3], 1
    %s1136 = scalar_lea.sflag [#allocation3], 1
    %1137 = vsyncpa %s1136, 1
    %1138 = vsyncpa [#allocation6], 1
    %1139 = vsyncpa [#allocation9], 1
    %1140 = vsyncpa [#allocation4], 1
    %s1141 = scalar_lea.sflag [#allocation4], 1
    %1142 = vsyncpa %s1141, 1

</llo_original>
